<compile_context>
chip_gen: v6e
topology: v6e:2x2x1
jax: 0.10.0
libtpu: 0.0.40
codegen_flags: <defaults>
</compile_context>

<pallas_src>
import jax
import jax.numpy as jnp
from jax.experimental import pallas as pl
from jax.experimental.pallas import tpu as pltpu


def pointnet_fc_kernel(x_ref, w1_ref, b1_ref, w2_ref, b2_ref, o_ref):
    # x_ref: (TILE_N, C); w1_ref: (C, H); b1_ref: (1, H); w2_ref: (H, C); b2_ref: (1, C)
    x = x_ref[...]

    # fc1 (1x1 conv == matmul), f32 accumulation on the MXU, + bias + ReLU in f32.
    h = jnp.dot(x, w1_ref[...], preferred_element_type=jnp.float32)
    h = h + b1_ref[...].astype(jnp.float32)
    h = jnp.maximum(h, 0.0)

    # fc2 (1x1 conv == matmul) + bias + sigmoid (EUP), store in output dtype.
    o = jnp.dot(h.astype(w2_ref.dtype), w2_ref[...],
                preferred_element_type=jnp.float32)
    o = o + b2_ref[...].astype(jnp.float32)
    o_ref[...] = jax.nn.sigmoid(o).astype(o_ref.dtype)


def _pick_tile_n(n, c, in_bytes, out_bytes, vmem_budget_bytes=24 << 20):
    """Rows per grid step: big enough to amortize the ~0.35us step overhead,
    small enough that double-buffered in/out tiles fit v7x's scoped VMEM."""
    per_row = 2 * c * (in_bytes + out_bytes)  # double-buffered input + output tile
    tile = max(8, min(1024, vmem_budget_bytes // max(per_row, 1)))
    tile = (tile // 8) * 8                    # sublane-aligned
    if n <= tile:
        return n                              # single full-array block
    return tile


def pointnet_fc(x, w1, b1, w2, b2):
    """x: (N, C).  Returns (N, C, 1, 1) matching the PyTorch output shape."""
    n, c = x.shape
    hidden = w1.shape[1]
    assert w1.shape == (c, hidden)
    assert w2.shape == (hidden, c)

    out_dtype = x.dtype
    in_bytes = jnp.dtype(x.dtype).itemsize
    out_bytes = jnp.dtype(out_dtype).itemsize
    tile_n = _pick_tile_n(n, c, in_bytes, out_bytes)
    grid = (pl.cdiv(n, tile_n),)

    b1_2d = b1.reshape(1, hidden)
    b2_2d = b2.reshape(1, c)

    weight_bytes = (w1.size + w2.size) * jnp.dtype(w1.dtype).itemsize \
        + (b1.size + b2.size) * jnp.dtype(b1.dtype).itemsize
    cost = pl.CostEstimate(
        flops=4 * n * c * hidden,                       # two matmuls
        transcendentals=n * c,                          # sigmoid exp
        bytes_accessed=n * c * (in_bytes + out_bytes) + weight_bytes,
    )

    out2d = pl.pallas_call(
        pointnet_fc_kernel,
        out_shape=jax.ShapeDtypeStruct((n, c), out_dtype),
        grid=grid,
        in_specs=[
            # activations: tiled over the batch, auto double-buffered
            pl.BlockSpec((tile_n, c), lambda i: (i, 0)),
            # weights / biases: constant index_map -> VMEM-resident for whole grid
            pl.BlockSpec((c, hidden), lambda i: (0, 0)),
            pl.BlockSpec((1, hidden), lambda i: (0, 0)),
            pl.BlockSpec((hidden, c), lambda i: (0, 0)),
            pl.BlockSpec((1, c), lambda i: (0, 0)),
        ],
        out_specs=pl.BlockSpec((tile_n, c), lambda i: (i, 0)),
        compiler_params=pltpu.CompilerParams(
            dimension_semantics=("parallel",),          # megacore shard on v7x
        ),
        cost_estimate=cost,
    )(x, w1, b1_2d, w2, b2_2d)

    # match PyTorch: (N, C, 1, 1)
    return out2d.reshape(n, c, 1, 1)


def init_params(key, channels, reduction):
    """Deterministic param init mimicking Conv2d default (kaiming-uniform-ish)."""
    hidden = channels // reduction
    k1, k2, k3, k4 = jax.random.split(key, 4)
    bound1 = 1.0 / (channels ** 0.5)
    bound2 = 1.0 / (hidden ** 0.5)
    # Stored as (Cin, Cout) so the kernel does x @ W directly.
    w1 = jax.random.uniform(k1, (channels, hidden), jnp.float32, -bound1, bound1)
    b1 = jax.random.uniform(k2, (hidden,), jnp.float32, -bound1, bound1)
    w2 = jax.random.uniform(k3, (hidden, channels), jnp.float32, -bound2, bound2)
    b2 = jax.random.uniform(k4, (channels,), jnp.float32, -bound2, bound2)
    return w1, b1, w2, b2


def _ref(x, w1, b1, w2, b2):
    n, c = x.shape
    return jax.nn.sigmoid(jnp.maximum(x @ w1 + b1, 0.0) @ w2 + b2).reshape(n, c, 1, 1)


if __name__ == "__main__":
    channels = 32
    reduction = 4

    key = jax.random.PRNGKey(0)
    kx, kp, kx2 = jax.random.split(key, 3)
    w1, b1, w2, b2 = init_params(kp, channels, reduction)

    # Small shape (single full-array block).
    batch = 8
    x = jax.random.normal(kx, (batch, channels), jnp.float32)
    out = jax.block_until_ready(pointnet_fc(x, w1, b1, w2, b2))
    assert out.shape == (batch, channels, 1, 1)
    assert jnp.allclose(out, _ref(x, w1, b1, w2, b2), atol=1e-5, rtol=1e-5)

    # Larger batch to exercise the batch grid + partial last tile.
    batch2 = 1536
    x2 = jax.random.normal(kx2, (batch2, channels), jnp.float32)
    out2 = jax.block_until_ready(pointnet_fc(x2, w1, b1, w2, b2))
    assert out2.shape == (batch2, channels, 1, 1)
    assert jnp.allclose(out2, _ref(x2, w1, b1, w2, b2), atol=1e-5, rtol=1e-5)

    print("KERNEL_OK")
</pallas_src>

<mosaic_0001>
module attributes {stable_mosaic.version = 11 : i64} {
  func.func @pointnet_fc_kernel(%arg0: i32, %arg1: memref<8x32xf32, #tpu.memory_space<vmem>>, %arg2: memref<32x8xf32, #tpu.memory_space<vmem>>, %arg3: memref<1x8xf32, #tpu.memory_space<vmem>>, %arg4: memref<8x32xf32, #tpu.memory_space<vmem>>, %arg5: memref<1x32xf32, #tpu.memory_space<vmem>>, %arg6: memref<8x32xf32, #tpu.memory_space<vmem>>) attributes {dimension_semantics = [#tpu.dimension_semantics<parallel>], iteration_bounds = array<i64: 1>, scalar_prefetch = 0 : i64, scratch_operands = 0 : i64, tpu.core_type = #tpu.core_type<tc>, window_params = [{transform_indices = @transform_0, window_bounds = array<i64: 8, 32>}, {pipeline_mode = #tpu.pipeline_mode<synchronous>, transform_indices = @transform_1, window_bounds = array<i64: 32, 8>}, {pipeline_mode = #tpu.pipeline_mode<synchronous>, transform_indices = @transform_2, window_bounds = array<i64: 1, 8>}, {pipeline_mode = #tpu.pipeline_mode<synchronous>, transform_indices = @transform_3, window_bounds = array<i64: 8, 32>}, {pipeline_mode = #tpu.pipeline_mode<synchronous>, transform_indices = @transform_4, window_bounds = array<i64: 1, 32>}, {transform_indices = @transform_5, window_bounds = array<i64: 8, 32>}]} {
    %c0 = arith.constant 0 : index
    %c0_0 = arith.constant 0 : index
    %0 = vector.load %arg1[%c0, %c0_0] : memref<8x32xf32, #tpu.memory_space<vmem>>, vector<8x32xf32>
    %c0_1 = arith.constant 0 : index
    %c0_2 = arith.constant 0 : index
    %1 = vector.load %arg2[%c0_1, %c0_2] : memref<32x8xf32, #tpu.memory_space<vmem>>, vector<32x8xf32>
    %cst = arith.constant dense<0.000000e+00> : vector<8x8xf32>
    %2 = tpu.matmul %0, %1, %cst {dimension_numbers = #tpu.dot_dimension_numbers<[1], [0], [0], [1], [0, 0, 1, 1], [], []>} : vector<8x32xf32>, vector<32x8xf32>, vector<8x8xf32> -> vector<8x8xf32>
    %c0_3 = arith.constant 0 : index
    %c0_4 = arith.constant 0 : index
    %3 = vector.load %arg3[%c0_3, %c0_4] : memref<1x8xf32, #tpu.memory_space<vmem>>, vector<1x8xf32>
    %4 = vector.broadcast %3 : vector<1x8xf32> to vector<8x8xf32>
    %5 = arith.addf %2, %4 : vector<8x8xf32>
    %cst_5 = arith.constant 0.000000e+00 : f32
    %6 = vector.broadcast %cst_5 : f32 to vector<8x8xf32>
    %7 = arith.maximumf %5, %6 : vector<8x8xf32>
    %c0_6 = arith.constant 0 : index
    %c0_7 = arith.constant 0 : index
    %8 = vector.load %arg4[%c0_6, %c0_7] : memref<8x32xf32, #tpu.memory_space<vmem>>, vector<8x32xf32>
    %cst_8 = arith.constant dense<0.000000e+00> : vector<8x32xf32>
    %9 = tpu.matmul %7, %8, %cst_8 {dimension_numbers = #tpu.dot_dimension_numbers<[1], [0], [0], [1], [0, 0, 1, 1], [], []>} : vector<8x8xf32>, vector<8x32xf32>, vector<8x32xf32> -> vector<8x32xf32>
    %c0_9 = arith.constant 0 : index
    %c0_10 = arith.constant 0 : index
    %10 = vector.load %arg5[%c0_9, %c0_10] : memref<1x32xf32, #tpu.memory_space<vmem>>, vector<1x32xf32>
    %11 = vector.broadcast %10 : vector<1x32xf32> to vector<8x32xf32>
    %12 = arith.addf %9, %11 : vector<8x32xf32>
    %13 = arith.negf %12 : vector<8x32xf32>
    %14 = math.exp %13 : vector<8x32xf32>
    %cst_11 = arith.constant 1.000000e+00 : f32
    %15 = vector.broadcast %cst_11 : f32 to vector<8x32xf32>
    %16 = arith.addf %15, %14 : vector<8x32xf32>
    %17 = arith.divf %15, %16 : vector<8x32xf32>
    %c0_12 = arith.constant 0 : index
    %c0_13 = arith.constant 0 : index
    %18 = vector.load %arg6[%c0_12, %c0_13] : memref<8x32xf32, #tpu.memory_space<vmem>>, vector<8x32xf32>
    tpu.vector_store %arg6[%c0_12, %c0_13], %17 {strides = array<i32>} : memref<8x32xf32, #tpu.memory_space<vmem>>, vector<8x32xf32>,
    return
  }
  func.func @transform_0(%arg0: i32) -> (i32, i32) {
    %c0_i32 = arith.constant 0 : i32
    %c0_i32_0 = arith.constant 0 : i32
    return %arg0, %c0_i32 : i32, i32
  }
  func.func @transform_1(%arg0: i32) -> (i32, i32) {
    %c0_i32 = arith.constant 0 : i32
    %c0_i32_0 = arith.constant 0 : i32
    %c0_i32_1 = arith.constant 0 : i32
    return %c0_i32, %c0_i32_0 : i32, i32
  }
  func.func @transform_2(%arg0: i32) -> (i32, i32) {
    %c0_i32 = arith.constant 0 : i32
    %c0_i32_0 = arith.constant 0 : i32
    %c0_i32_1 = arith.constant 0 : i32
    return %c0_i32, %c0_i32_0 : i32, i32
  }
  func.func @transform_3(%arg0: i32) -> (i32, i32) {
    %c0_i32 = arith.constant 0 : i32
    %c0_i32_0 = arith.constant 0 : i32
    %c0_i32_1 = arith.constant 0 : i32
    return %c0_i32, %c0_i32_0 : i32, i32
  }
  func.func @transform_4(%arg0: i32) -> (i32, i32) {
    %c0_i32 = arith.constant 0 : i32
    %c0_i32_0 = arith.constant 0 : i32
    %c0_i32_1 = arith.constant 0 : i32
    return %c0_i32, %c0_i32_0 : i32, i32
  }
  func.func @transform_5(%arg0: i32) -> (i32, i32) {
    %c0_i32 = arith.constant 0 : i32
    %c0_i32_0 = arith.constant 0 : i32
    return %arg0, %c0_i32 : i32, i32
  }
}

</mosaic_0001>

<llo_original>
// kernel: tpu_custom_call.1
$region0: #{tpu_custom_call.1}
  #allocation0 [shape = 'u32[]', space=smem, size = 0x4, offset = 0x4, fixed_abs, tag = 'smem constant byte address 0x4 - core index']
  #allocation1 [shape = 'u32[144,128]{1,0:T(1,128)}', space=vmem, size = 0x12000, scoped, tag = 'internal scratch']
  %s0 = inlined_call_operand.vmem [shape: f32[8,32], index: 0, kind: input, shape index: {}]
  %s1 = inlined_call_operand.vmem [shape: f32[32,8], index: 1, kind: input, shape index: {}]
  %s2 = inlined_call_operand.vmem [shape: f32[1,8], index: 2, kind: input, shape index: {}]
  %s3 = inlined_call_operand.vmem [shape: f32[8,32], index: 3, kind: input, shape index: {}]
  %s4 = inlined_call_operand.vmem [shape: f32[1,32], index: 4, kind: input, shape index: {}]
  %s5 = inlined_call_operand.hbm [shape: f32[8,32], index: 5, kind: output, shape index: {}]
  %s6 = sld [smem:[#allocation0]]
  $region30: #{tpu_custom_call.1} parent=0
    _
  %s8 = ssub.s32 1, %s6
  %s9 = scalar_select 0, %s8, %s6
  $region1: #{tpu_custom_call.1} parent=0
    #allocation2 [shape = 'u8[4096]{0}', space=vmem, size = 0x1000, scoped, tag = 'output window, operand 0, single buffered']
    #allocation3 [shape = 's32[1]{0}', space=sflag, size = 0x4, scoped, tag = 'scoped memory for tpu_custom_call.1']
    %10 = vsyncpa [#allocation3], 0
    // Predicated region
    $region2: #{tpu_custom_call.1} parent=1 // pred_check
      _
    $region3: #{tpu_custom_call.1} parent=1 // pred_check_branch
      %12 = sbr.rel (0) target = $region5
    $region4: #{tpu_custom_call.1} parent=1 // pred_region
      _
    $region5: #{tpu_custom_call.1} parent=1 // pred_fallthru
      _
    // Predicated region
    $region6: #{tpu_custom_call.1} parent=1 // pred_check
      _
    $region7: #{tpu_custom_call.1} parent=1 // pred_check_branch
      %14 = sbr.rel (0) target = $region9
    $region8: #{tpu_custom_call.1} parent=1 // pred_region
      _
    $region9: #{tpu_custom_call.1} parent=1 // pred_fallthru
      _
    // Predicated region
    $region10: #{tpu_custom_call.1} parent=1 // pred_check
      _
    $region11: #{tpu_custom_call.1} parent=1 // pred_check_branch
      %16 = sbr.rel (0) target = $region13
    $region12: #{tpu_custom_call.1} parent=1 // pred_region
      _
    $region13: #{tpu_custom_call.1} parent=1 // pred_fallthru
      _
    // Predicated region
    $region14: #{tpu_custom_call.1} parent=1 // pred_check
      _
    $region15: #{tpu_custom_call.1} parent=1 // pred_check_branch
      %18 = sbr.rel (0) target = $region17
    $region16: #{tpu_custom_call.1} parent=1 // pred_region
      _
    $region17: #{tpu_custom_call.1} parent=1 // pred_fallthru
      _
    // Predicated region
    $region18: #{tpu_custom_call.1} parent=1 // pred_check
      _
    $region19: #{tpu_custom_call.1} parent=1 // pred_check_branch
      %20 = sbr.rel (0) target = $region21
    $region20: #{tpu_custom_call.1} parent=1 // pred_region
      _
    $region21: #{tpu_custom_call.1} parent=1 // pred_fallthru
      _
    %v21 = vld [vmem:[%s0] sm:$0xff]
    %v22 = vld [vmem:[%s1] sm:$0xff]
    %v23 = vld [vmem:[%s1 + $0x8] sm:$0xff]
    %v24 = vld [vmem:[%s1 + $0x10] sm:$0xff]
    %v25 = vld [vmem:[%s1 + $0x18] sm:$0xff]
    %v26 = vld [vmem:[%s2] sm:$0x1]
    %v28 = vlaneseq
    %v29 = vshrl.u32 %v28, 7
    %v30 = vsub.s32 0, %v29
    %v31 = vrot.slane %v26, %v30
    %vm33 = vcmask 261120
    %v35 = vsel %vm33, %v21, 0
    %37 = vmatprep.subr.mxu0 0.0
    %38 = vmatpush1.msra.mxu0 0.0
    %39 = vmatprep.subr.mxu0 0.0
    %40 = vmatpush1.msra.mxu0 0.0
    %41 = vmatprep.subr.mxu0 0.0
    %42 = vmatpush1.msra.mxu0 0.0
    %43 = vmatprep.subr.mxu0 0.0
    %44 = vmatpush1.msra.mxu0 0.0
    %45 = vmatprep.subr.mxu0 0.0
    %46 = vmatpush1.msra.mxu0 0.0
    %47 = vmatprep.subr.mxu0 0.0
    %48 = vmatpush1.msra.mxu0 0.0
    %49 = vmatprep.subr.mxu0 0.0
    %50 = vmatpush1.msra.mxu0 0.0
    %51 = vmatprep.subr.mxu0 0.0
    %52 = vmatpush1.msra.mxu0 0.0
    %53 = vmatprep.subr.mxu0 0.0
    %54 = vmatpush1.msra.mxu0 0.0
    %55 = vmatprep.subr.mxu0 0.0
    %56 = vmatpush1.msra.mxu0 0.0
    %57 = vmatprep.subr.mxu0 0.0
    %58 = vmatpush1.msra.mxu0 0.0
    %59 = vmatprep.subr.mxu0 0.0
    %60 = vmatpush1.msra.mxu0 0.0
    %61 = vmatprep.subr.mxu0 0.0
    %62 = vmatpush1.msra.mxu0 %v25
    %63 = vmatprep.subr.mxu0 0.0
    %64 = vmatpush1.msra.mxu0 %v24
    %65 = vmatprep.subr.mxu0 0.0
    %66 = vmatpush1.msra.mxu0 %v23
    %67 = vmatprep.subr.mxu0 0.0
    %68 = vmatpush1.msra.mxu0 %v22
    %69 = vmatprep.subr.mxu0 0.0
    %70 = vmatpush2.msra.mxu0 0.0
    %71 = vmatprep.subr.mxu0 0.0
    %72 = vmatpush2.msra.mxu0 0.0
    %73 = vmatprep.subr.mxu0 0.0
    %74 = vmatpush2.msra.mxu0 0.0
    %75 = vmatprep.subr.mxu0 0.0
    %76 = vmatpush2.msra.mxu0 0.0
    %77 = vmatprep.subr.mxu0 0.0
    %78 = vmatpush2.msra.mxu0 0.0
    %79 = vmatprep.subr.mxu0 0.0
    %80 = vmatpush2.msra.mxu0 0.0
    %81 = vmatprep.subr.mxu0 0.0
    %82 = vmatpush2.msra.mxu0 0.0
    %83 = vmatprep.subr.mxu0 0.0
    %84 = vmatpush2.msra.mxu0 0.0
    %85 = vmatprep.subr.mxu0 0.0
    %86 = vmatpush2.msra.mxu0 0.0
    %87 = vmatprep.subr.mxu0 0.0
    %88 = vmatpush2.msra.mxu0 0.0
    %89 = vmatprep.subr.mxu0 0.0
    %90 = vmatpush2.msra.mxu0 0.0
    %91 = vmatprep.subr.mxu0 0.0
    %92 = vmatpush2.msra.mxu0 0.0
    %93 = vmatprep.subr.mxu0 0.0
    %94 = vmatpush2.msra.mxu0 0.0
    %95 = vmatprep.subr.mxu0 0.0
    %96 = vmatpush2.msra.mxu0 0.0
    %97 = vmatprep.subr.mxu0 0.0
    %98 = vmatpush2.msra.mxu0 0.0
    %99 = vmatprep.subr.mxu0 0.0
    %100 = vmatpush2.msra.mxu0 0.0
    %101 = vmatprep.mubr.f32.mxu0 0.0
    %102 = vmatmul.mubr.f32.gmra.mxu0 %v35
    %v103 = vpop.f32.mrf.mxu0
    %v104 = vadd.f32 %v31, %v103
    %v105 = vpop.f32.mrf.mxu0
    %106 = vdwg.mxu0
    %v107 = vmax.f32 %v104, 0.0
    %v108 = vld [vmem:[%s3] sm:$0xff]
    %v109 = vld [vmem:[%s4] sm:$0x1]
    %v111 = vlaneseq
    %v112 = vshrl.u32 %v111, 7
    %v113 = vsub.s32 0, %v112
    %v114 = vrot.slane %v109, %v113
    %vm116 = vcmask 64512
    %v118 = vsel %vm116, %v107, 0
    %120 = vmatprep.subr.mxu0 0.0
    %121 = vmatpush1.msra.mxu0 0.0
    %122 = vmatprep.subr.mxu0 0.0
    %123 = vmatpush1.msra.mxu0 0.0
    %124 = vmatprep.subr.mxu0 0.0
    %125 = vmatpush1.msra.mxu0 0.0
    %126 = vmatprep.subr.mxu0 0.0
    %127 = vmatpush1.msra.mxu0 0.0
    %128 = vmatprep.subr.mxu0 0.0
    %129 = vmatpush1.msra.mxu0 0.0
    %130 = vmatprep.subr.mxu0 0.0
    %131 = vmatpush1.msra.mxu0 0.0
    %132 = vmatprep.subr.mxu0 0.0
    %133 = vmatpush1.msra.mxu0 0.0
    %134 = vmatprep.subr.mxu0 0.0
    %135 = vmatpush1.msra.mxu0 0.0
    %136 = vmatprep.subr.mxu0 0.0
    %137 = vmatpush1.msra.mxu0 0.0
    %138 = vmatprep.subr.mxu0 0.0
    %139 = vmatpush1.msra.mxu0 0.0
    %140 = vmatprep.subr.mxu0 0.0
    %141 = vmatpush1.msra.mxu0 0.0
    %142 = vmatprep.subr.mxu0 0.0
    %143 = vmatpush1.msra.mxu0 0.0
    %144 = vmatprep.subr.mxu0 0.0
    %145 = vmatpush1.msra.mxu0 0.0
    %146 = vmatprep.subr.mxu0 0.0
    %147 = vmatpush1.msra.mxu0 0.0
    %148 = vmatprep.subr.mxu0 0.0
    %149 = vmatpush1.msra.mxu0 0.0
    %150 = vmatprep.subr.mxu0 0.0
    %151 = vmatpush1.msra.mxu0 %v108
    %152 = vmatprep.subr.mxu0 0.0
    %153 = vmatpush2.msra.mxu0 0.0
    %154 = vmatprep.subr.mxu0 0.0
    %155 = vmatpush2.msra.mxu0 0.0
    %156 = vmatprep.subr.mxu0 0.0
    %157 = vmatpush2.msra.mxu0 0.0
    %158 = vmatprep.subr.mxu0 0.0
    %159 = vmatpush2.msra.mxu0 0.0
    %160 = vmatprep.subr.mxu0 0.0
    %161 = vmatpush2.msra.mxu0 0.0
    %162 = vmatprep.subr.mxu0 0.0
    %163 = vmatpush2.msra.mxu0 0.0
    %164 = vmatprep.subr.mxu0 0.0
    %165 = vmatpush2.msra.mxu0 0.0
    %166 = vmatprep.subr.mxu0 0.0
    %167 = vmatpush2.msra.mxu0 0.0
    %168 = vmatprep.subr.mxu0 0.0
    %169 = vmatpush2.msra.mxu0 0.0
    %170 = vmatprep.subr.mxu0 0.0
    %171 = vmatpush2.msra.mxu0 0.0
    %172 = vmatprep.subr.mxu0 0.0
    %173 = vmatpush2.msra.mxu0 0.0
    %174 = vmatprep.subr.mxu0 0.0
    %175 = vmatpush2.msra.mxu0 0.0
    %176 = vmatprep.subr.mxu0 0.0
    %177 = vmatpush2.msra.mxu0 0.0
    %178 = vmatprep.subr.mxu0 0.0
    %179 = vmatpush2.msra.mxu0 0.0
    %180 = vmatprep.subr.mxu0 0.0
    %181 = vmatpush2.msra.mxu0 0.0
    %182 = vmatprep.subr.mxu0 0.0
    %183 = vmatpush2.msra.mxu0 0.0
    %184 = vmatprep.mubr.f32.mxu0 0.0
    %185 = vmatmul.mubr.f32.gmra.mxu0 %v118
    %v186 = vpop.f32.mrf.mxu0
    %v187 = vadd.f32 %v114, %v186
    %v188 = vpop.f32.mrf.mxu0
    %189 = vdwg.mxu0
    %v190 = vxor.u32 %v187, 2147483648
    %v191 = vmul.f32 %v190, 1.442695
    %v192 = vpow.pop %v191
    %v193 = vadd.f32 %v192, 1.0
    %v194 = vrcp.pop %v193
    %v195 = vmul.f32 1.0, %v194
    %196 = vst.msk [vmem:[#allocation2] sm:$0xff] %vm33, %v195
    // Predicated region
    $region22: #{tpu_custom_call.1} parent=1 // pred_check
      _
    $region23: #{tpu_custom_call.1} parent=1 // pred_check_branch
      %198 = sbr.rel (0) target = $region25
    $region24: #{tpu_custom_call.1} parent=1 // pred_region
      %s200 = ssub.s32 128, 128
      %201 = vsyncadd [#allocation3], %s200
      %s203 = sshll.u32 [#allocation2], 4
      %s204 = int_to_ptr.vmem [resolvable:$true] %s203
      %206 = dma.vmem_to_hbm [thread:$0]  %s204, 128, %s5, [#allocation3]
    $region25: #{tpu_custom_call.1} parent=1 // pred_fallthru
      _
    // Predicated region
    $region26: #{tpu_custom_call.1} parent=1 // pred_check
      _
    $region27: #{tpu_custom_call.1} parent=1 // pred_check_branch
      %208 = sbr.rel (0) target = $region29
    $region28: #{tpu_custom_call.1} parent=1 // pred_region
      %209 = dma.done [#allocation3], 128
    $region29: #{tpu_custom_call.1} parent=1 // pred_fallthru
      _
    %210 = vsyncpa [#allocation3], 1

</llo_original>
